<compile_context>
chip_gen: v6e
topology: v6e:2x2x1
jax: 0.10.0
libtpu: 0.0.40
codegen_flags: <defaults>
</compile_context>

<pallas_src>
import jax
import jax.numpy as jnp
from jax.experimental import pallas as pl
from jax.experimental.pallas import tpu as pltpu

FEAT_DIM = 768      # CLIP ViT-L/14 feature width
NUM_TEXT = 2        # "positive" / "negative" prompts
MAX_TILE_B = 2048   # bf16 feats: 2 x 3 MiB double-buffered input -> fits every generation's VMEM


def _round_up(x, m):
    return ((x + m - 1) // m) * m


def _clip_sim_kernel(txt_ref, img_ref, o_ref):
    """o = (img / ||img||) @ txt_scaled, with txt_scaled = 100 * text_norm.T (pre-computed)."""
    img = img_ref[...].astype(jnp.float32)                                # [TB, 768] f32 in-register
    # L2 normalization factor: square-sum on VPU/XLU, rsqrt on the EUP slot.
    inv = jax.lax.rsqrt(jnp.sum(img * img, axis=-1, keepdims=True))       # [TB, 1]
    # Per-row dot products with the (already normalized, 100x-scaled) text embeddings on
    # the otherwise idle MXU; f32 accumulation.
    d = jnp.dot(img, txt_ref[...], preferred_element_type=jnp.float32)    # [TB, 2]
    o_ref[...] = d * inv                                                  # [TB, 2] f32


def clip_similarity(image_features, text_features, *, max_tile_b=MAX_TILE_B):
    """image_features: [B, 768] (any float dtype), text_features: [NUM_TEXT, 768]
    -> similarity [B, NUM_TEXT] (squeezed, matching torch .squeeze())."""
    feats = image_features                      # keep native dtype (bf16 halves HBM traffic)
    B, D = feats.shape
    ntxt = text_features.shape[0]

    # Pre-normalize + fold the 100x scale into the tiny text matrix once (2 x 768, f32 to
    # avoid bf16's ~0.4% error on values scaled by 100), transpose for the in-kernel dot.
    txt = text_features.astype(jnp.float32)
    txt_n = txt / jnp.linalg.norm(txt, axis=-1, keepdims=True)
    txt_t = (100.0 * txt_n).T                                              # [768, NUM_TEXT]

    # Batch tiling: sublane-aligned, capped for VMEM, and sized for >= 2 grid steps when the
    # batch is large so dimension_semantics=("parallel",) can shard across v7x's 2 TCs.
    tile_b = max(8, min(max_tile_b, _round_up(pl.cdiv(B, 2), 8)))
    grid = (pl.cdiv(B, tile_b),)

    cost = pl.CostEstimate(
        flops=2 * B * D + 2 * B * D * ntxt + 2 * B * ntxt,
        transcendentals=B,
        bytes_accessed=B * D * feats.dtype.itemsize + ntxt * D * 4 + B * ntxt * 4,
    )

    out = pl.pallas_call(
        _clip_sim_kernel,
        out_shape=jax.ShapeDtypeStruct((B, ntxt), jnp.float32),
        grid=grid,
        in_specs=[
            pl.BlockSpec((D, ntxt), lambda i: (0, 0)),      # scaled text^T: VMEM-resident
            pl.BlockSpec((tile_b, D), lambda i: (i, 0)),    # image features: pipelined over batch
        ],
        out_specs=pl.BlockSpec((tile_b, ntxt), lambda i: (i, 0)),
        compiler_params=pltpu.CompilerParams(
            dimension_semantics=("parallel",),
            vmem_limit_bytes=32 * 1024 * 1024,
        ),
        cost_estimate=cost,
    )(txt_t, feats)

    return jnp.squeeze(out)   # matches torch .squeeze()


def stub_encode_image(x_img, w_stub):
    # TODO(synk): CLIP ViT-L/14 encode_image (pretrained backbone) is not reproducible
    # in-script; deterministic linear stub producing 768-d image features (bf16, like a
    # real mixed-precision CLIP backbone).
    B = x_img.shape[0]
    feats = x_img.reshape(B, -1).astype(jnp.float32) @ w_stub             # [B, 768]
    return feats.astype(jnp.bfloat16)


def reference_forward(image_features, text_features):
    """Pure-JAX reference of ClipSimModel_Infer.forward (given the encoded features)."""
    i = image_features.astype(jnp.float32)
    t = text_features.astype(jnp.float32)
    t = t / jnp.linalg.norm(t, axis=-1, keepdims=True)
    i = i / jnp.linalg.norm(i, axis=-1, keepdims=True)
    return jnp.squeeze(100.0 * i @ t.T)


if __name__ == "__main__":
    key = jax.random.PRNGKey(0)
    k_img, k_stub, k_txt = jax.random.split(key, 3)

    # Small NCHW RGB image batch, consistent with the module's forward (CLIP takes RGB images).
    B, C, H, W = 4, 3, 16, 16
    x_img = jax.random.normal(k_img, (B, C, H, W), dtype=jnp.float32)

    # Deterministic stub "encoder" weight (plain-JAX glue, see TODO in stub_encode_image).
    w_stub = jax.random.normal(k_stub, (C * H * W, FEAT_DIM), dtype=jnp.float32) * 0.02

    # TODO(synk): MMM.encode_text(clip.tokenize(prompts)) is an external pretrained text
    # encoder; deterministic stub buffer standing in for self.text_features.
    text_features = jax.random.normal(k_txt, (NUM_TEXT, FEAT_DIM), dtype=jnp.float32)

    feats = stub_encode_image(x_img, w_stub)                 # [B, 768] bf16
    out = clip_similarity(feats, text_features)              # [B, 2] f32
    out = jax.block_until_ready(out)

    assert out.shape == (B, NUM_TEXT) and out.dtype == jnp.float32
    ref = reference_forward(feats, text_features)
    assert bool(jnp.allclose(out, ref, atol=1e-3, rtol=1e-4))

    print("KERNEL_OK")
</pallas_src>

<mosaic_0001>
module attributes {stable_mosaic.version = 11 : i64} {
  func.func @_clip_sim_kernel(%arg0: i32, %arg1: memref<768x2xf32, #tpu.memory_space<vmem>>, %arg2: memref<8x768xbf16, #tpu.memory_space<vmem>>, %arg3: memref<8x2xf32, #tpu.memory_space<vmem>>) attributes {dimension_semantics = [#tpu.dimension_semantics<parallel>], iteration_bounds = array<i64: 1>, scalar_prefetch = 0 : i64, scratch_operands = 0 : i64, tpu.core_type = #tpu.core_type<tc>, window_params = [{pipeline_mode = #tpu.pipeline_mode<synchronous>, transform_indices = @transform_0, window_bounds = array<i64: 768, 2>}, {transform_indices = @transform_1, window_bounds = array<i64: 8, 768>}, {transform_indices = @transform_2, window_bounds = array<i64: 8, 2>}]} {
    %c0 = arith.constant 0 : index
    %c0_0 = arith.constant 0 : index
    %0 = vector.load %arg2[%c0, %c0_0] : memref<8x768xbf16, #tpu.memory_space<vmem>>, vector<8x768xbf16>
    %1 = arith.extf %0 : vector<8x768xbf16> to vector<8x768xf32>
    %2 = arith.mulf %1, %1 : vector<8x768xf32>
    %cst = arith.constant dense<0.000000e+00> : vector<8xf32>
    %3 = vector.multi_reduction <add>, %2, %cst [1] : vector<8x768xf32> to vector<8xf32>
    %4 = vector.shape_cast %3 : vector<8xf32> to vector<8x1xf32>
    %5 = math.rsqrt %4 : vector<8x1xf32>
    %c0_1 = arith.constant 0 : index
    %c0_2 = arith.constant 0 : index
    %6 = vector.load %arg1[%c0_1, %c0_2] : memref<768x2xf32, #tpu.memory_space<vmem>>, vector<768x2xf32>
    %cst_3 = arith.constant dense<0.000000e+00> : vector<8x2xf32>
    %7 = tpu.matmul %1, %6, %cst_3 {dimension_numbers = #tpu.dot_dimension_numbers<[1], [0], [0], [1], [0, 0, 1, 1], [], []>} : vector<8x768xf32>, vector<768x2xf32>, vector<8x2xf32> -> vector<8x2xf32>
    %8 = vector.broadcast %5 : vector<8x1xf32> to vector<8x2xf32>
    %9 = arith.mulf %7, %8 : vector<8x2xf32>
    %c0_4 = arith.constant 0 : index
    %c0_5 = arith.constant 0 : index
    %10 = vector.load %arg3[%c0_4, %c0_5] : memref<8x2xf32, #tpu.memory_space<vmem>>, vector<8x2xf32>
    tpu.vector_store %arg3[%c0_4, %c0_5], %9 {strides = array<i32>} : memref<8x2xf32, #tpu.memory_space<vmem>>, vector<8x2xf32>,
    return
  }
  func.func @transform_0(%arg0: i32) -> (i32, i32) {
    %c0_i32 = arith.constant 0 : i32
    %c0_i32_0 = arith.constant 0 : i32
    %c0_i32_1 = arith.constant 0 : i32
    return %c0_i32, %c0_i32_0 : i32, i32
  }
  func.func @transform_1(%arg0: i32) -> (i32, i32) {
    %c0_i32 = arith.constant 0 : i32
    %c0_i32_0 = arith.constant 0 : i32
    return %arg0, %c0_i32 : i32, i32
  }
  func.func @transform_2(%arg0: i32) -> (i32, i32) {
    %c0_i32 = arith.constant 0 : i32
    %c0_i32_0 = arith.constant 0 : i32
    return %arg0, %c0_i32 : i32, i32
  }
}

</mosaic_0001>

<llo_original>
// kernel: tpu_custom_call.1
$region0: #{tpu_custom_call.1}
  #allocation0 [shape = 'u32[]', space=smem, size = 0x4, offset = 0x4, fixed_abs, tag = 'smem constant byte address 0x4 - core index']
  #allocation1 [shape = 'u32[144,128]{1,0:T(1,128)}', space=vmem, size = 0x12000, scoped, tag = 'internal scratch']
  %s0 = inlined_call_operand.vmem [shape: f32[768,2], index: 0, kind: input, shape index: {}]
  %s1 = inlined_call_operand.vmem [shape: bf16[4,768], index: 1, kind: input, shape index: {}]
  %s2 = inlined_call_operand.vmem [shape: f32[4,2], index: 2, kind: output, shape index: {}]
  %s3 = sld [smem:[#allocation0]]
  $region48: #{tpu_custom_call.1} parent=0
    _
  %s5 = ssub.s32 1, %s3
  %s6 = scalar_select 0, %s5, %s3
  $region1: #{tpu_custom_call.1} parent=0
    #allocation2 [shape = 'u8[4096]{0}', space=vmem, size = 0x1000, scoped, tag = 'output window, operand 0, single buffered']
    // Predicated region
    $region2: #{tpu_custom_call.1} parent=1 // pred_check
      _
    $region3: #{tpu_custom_call.1} parent=1 // pred_check_branch
      %8 = sbr.rel (0) target = $region5
    $region4: #{tpu_custom_call.1} parent=1 // pred_region
      _
    $region5: #{tpu_custom_call.1} parent=1 // pred_fallthru
      _
    // Predicated region
    $region6: #{tpu_custom_call.1} parent=1 // pred_check
      _
    $region7: #{tpu_custom_call.1} parent=1 // pred_check_branch
      %10 = sbr.rel (0) target = $region9
    $region8: #{tpu_custom_call.1} parent=1 // pred_region
      _
    $region9: #{tpu_custom_call.1} parent=1 // pred_fallthru
      _
    %v11 = vld [vmem:[%s1] sm:$0xff]
    %v12 = vld [vmem:[%s1 + $0x8] sm:$0xf]
    %v13 = vld [vmem:[%s1 + $0xc] sm:$0xff]
    %v14 = vld [vmem:[%s1 + $0x14] sm:$0xf]
    %v15 = vunpack.c.l.bf16 %v11
    %v16 = vunpack.c.h.bf16 %v11
    %v17 = vunpack.c.l.bf16 %v12
    %v18 = vunpack.c.l.bf16 %v13
    %v19 = vunpack.c.h.bf16 %v13
    %v20 = vunpack.c.l.bf16 %v14
    %v21 = vmul.f32 %v15, %v15
    %v22 = vmul.f32 %v16, %v16
    %v23 = vmul.f32 %v17, %v17
    %v24 = vmul.f32 %v18, %v18
    %v25 = vmul.f32 %v19, %v19
    %v26 = vmul.f32 %v20, %v20
    %v33 = vcombine.low %v21, %v24
    %v34 = vcombine.high %v21, %v24
    %v35 = vcombine.low %v22, %v25
    %v36 = vcombine.high %v22, %v25
    %v37 = vcombine.low %v23, %v26
    %v38 = vcombine.high %v23, %v26
    %v45 = vadd.f32 %v33, %v34
    %v46 = vadd.f32 %v45, %v35
    %v47 = vadd.f32 %v46, %v36
    %v48 = vadd.f32 %v47, %v37
    %v49 = vadd.f32 %v48, %v38
    %50 = vadd.xlane.f32.xlu0 %v49
    %v51 = vpop.xlane.xlu0 %50
    %v52 = vrsqrt.pop %v51
    %v53 = vld [vmem:[%s0] sm:$0xff]
    %v54 = vld [vmem:[%s0 + $0x8] sm:$0xff]
    %v55 = vld [vmem:[%s0 + $0x10] sm:$0xff]
    %v56 = vld [vmem:[%s0 + $0x18] sm:$0xff]
    %v57 = vld [vmem:[%s0 + $0x20] sm:$0xff]
    %v58 = vld [vmem:[%s0 + $0x28] sm:$0xff]
    %v59 = vld [vmem:[%s0 + $0x30] sm:$0xff]
    %v60 = vld [vmem:[%s0 + $0x38] sm:$0xff]
    %v61 = vld [vmem:[%s0 + $0x40] sm:$0xff]
    %v62 = vld [vmem:[%s0 + $0x48] sm:$0xff]
    %v63 = vld [vmem:[%s0 + $0x50] sm:$0xff]
    %v64 = vld [vmem:[%s0 + $0x58] sm:$0xff]
    %v65 = vld [vmem:[%s0 + $0x60] sm:$0xff]
    %v66 = vld [vmem:[%s0 + $0x68] sm:$0xff]
    %v67 = vld [vmem:[%s0 + $0x70] sm:$0xff]
    %v68 = vld [vmem:[%s0 + $0x78] sm:$0xff]
    %v69 = vld [vmem:[%s0 + $0x80] sm:$0xff]
    %v70 = vld [vmem:[%s0 + $0x88] sm:$0xff]
    %v71 = vld [vmem:[%s0 + $0x90] sm:$0xff]
    %v72 = vld [vmem:[%s0 + $0x98] sm:$0xff]
    %v73 = vld [vmem:[%s0 + $0xa0] sm:$0xff]
    %v74 = vld [vmem:[%s0 + $0xa8] sm:$0xff]
    %v75 = vld [vmem:[%s0 + $0xb0] sm:$0xff]
    %v76 = vld [vmem:[%s0 + $0xb8] sm:$0xff]
    %v77 = vld [vmem:[%s0 + $0xc0] sm:$0xff]
    %v78 = vld [vmem:[%s0 + $0xc8] sm:$0xff]
    %v79 = vld [vmem:[%s0 + $0xd0] sm:$0xff]
    %v80 = vld [vmem:[%s0 + $0xd8] sm:$0xff]
    %v81 = vld [vmem:[%s0 + $0xe0] sm:$0xff]
    %v82 = vld [vmem:[%s0 + $0xe8] sm:$0xff]
    %v83 = vld [vmem:[%s0 + $0xf0] sm:$0xff]
    %v84 = vld [vmem:[%s0 + $0xf8] sm:$0xff]
    %v85 = vld [vmem:[%s0 + $0x100] sm:$0xff]
    %v86 = vld [vmem:[%s0 + $0x108] sm:$0xff]
    %v87 = vld [vmem:[%s0 + $0x110] sm:$0xff]
    %v88 = vld [vmem:[%s0 + $0x118] sm:$0xff]
    %v89 = vld [vmem:[%s0 + $0x120] sm:$0xff]
    %v90 = vld [vmem:[%s0 + $0x128] sm:$0xff]
    %v91 = vld [vmem:[%s0 + $0x130] sm:$0xff]
    %v92 = vld [vmem:[%s0 + $0x138] sm:$0xff]
    %v93 = vld [vmem:[%s0 + $0x140] sm:$0xff]
    %v94 = vld [vmem:[%s0 + $0x148] sm:$0xff]
    %v95 = vld [vmem:[%s0 + $0x150] sm:$0xff]
    %v96 = vld [vmem:[%s0 + $0x158] sm:$0xff]
    %v97 = vld [vmem:[%s0 + $0x160] sm:$0xff]
    %v98 = vld [vmem:[%s0 + $0x168] sm:$0xff]
    %v99 = vld [vmem:[%s0 + $0x170] sm:$0xff]
    %v100 = vld [vmem:[%s0 + $0x178] sm:$0xff]
    %v101 = vld [vmem:[%s0 + $0x180] sm:$0xff]
    %v102 = vld [vmem:[%s0 + $0x188] sm:$0xff]
    %v103 = vld [vmem:[%s0 + $0x190] sm:$0xff]
    %v104 = vld [vmem:[%s0 + $0x198] sm:$0xff]
    %v105 = vld [vmem:[%s0 + $0x1a0] sm:$0xff]
    %v106 = vld [vmem:[%s0 + $0x1a8] sm:$0xff]
    %v107 = vld [vmem:[%s0 + $0x1b0] sm:$0xff]
    %v108 = vld [vmem:[%s0 + $0x1b8] sm:$0xff]
    %v109 = vld [vmem:[%s0 + $0x1c0] sm:$0xff]
    %v110 = vld [vmem:[%s0 + $0x1c8] sm:$0xff]
    %v111 = vld [vmem:[%s0 + $0x1d0] sm:$0xff]
    %v112 = vld [vmem:[%s0 + $0x1d8] sm:$0xff]
    %v113 = vld [vmem:[%s0 + $0x1e0] sm:$0xff]
    %v114 = vld [vmem:[%s0 + $0x1e8] sm:$0xff]
    %v115 = vld [vmem:[%s0 + $0x1f0] sm:$0xff]
    %v116 = vld [vmem:[%s0 + $0x1f8] sm:$0xff]
    %v117 = vld [vmem:[%s0 + $0x200] sm:$0xff]
    %v118 = vld [vmem:[%s0 + $0x208] sm:$0xff]
    %v119 = vld [vmem:[%s0 + $0x210] sm:$0xff]
    %v120 = vld [vmem:[%s0 + $0x218] sm:$0xff]
    %v121 = vld [vmem:[%s0 + $0x220] sm:$0xff]
    %v122 = vld [vmem:[%s0 + $0x228] sm:$0xff]
    %v123 = vld [vmem:[%s0 + $0x230] sm:$0xff]
    %v124 = vld [vmem:[%s0 + $0x238] sm:$0xff]
    %v125 = vld [vmem:[%s0 + $0x240] sm:$0xff]
    %v126 = vld [vmem:[%s0 + $0x248] sm:$0xff]
    %v127 = vld [vmem:[%s0 + $0x250] sm:$0xff]
    %v128 = vld [vmem:[%s0 + $0x258] sm:$0xff]
    %v129 = vld [vmem:[%s0 + $0x260] sm:$0xff]
    %v130 = vld [vmem:[%s0 + $0x268] sm:$0xff]
    %v131 = vld [vmem:[%s0 + $0x270] sm:$0xff]
    %v132 = vld [vmem:[%s0 + $0x278] sm:$0xff]
    %v133 = vld [vmem:[%s0 + $0x280] sm:$0xff]
    %v134 = vld [vmem:[%s0 + $0x288] sm:$0xff]
    %v135 = vld [vmem:[%s0 + $0x290] sm:$0xff]
    %v136 = vld [vmem:[%s0 + $0x298] sm:$0xff]
    %v137 = vld [vmem:[%s0 + $0x2a0] sm:$0xff]
    %v138 = vld [vmem:[%s0 + $0x2a8] sm:$0xff]
    %v139 = vld [vmem:[%s0 + $0x2b0] sm:$0xff]
    %v140 = vld [vmem:[%s0 + $0x2b8] sm:$0xff]
    %v141 = vld [vmem:[%s0 + $0x2c0] sm:$0xff]
    %v142 = vld [vmem:[%s0 + $0x2c8] sm:$0xff]
    %v143 = vld [vmem:[%s0 + $0x2d0] sm:$0xff]
    %v144 = vld [vmem:[%s0 + $0x2d8] sm:$0xff]
    %v145 = vld [vmem:[%s0 + $0x2e0] sm:$0xff]
    %v146 = vld [vmem:[%s0 + $0x2e8] sm:$0xff]
    %v147 = vld [vmem:[%s0 + $0x2f0] sm:$0xff]
    %v148 = vld [vmem:[%s0 + $0x2f8] sm:$0xff]
    %v155 = vcombine.low %v15, %v18
    %v156 = vcombine.high %v15, %v18
    %v157 = vcombine.low %v16, %v19
    %v158 = vcombine.high %v16, %v19
    %v159 = vcombine.low %v17, %v20
    %v160 = vcombine.high %v17, %v20
    %167 = vmatprep.subr.mxu0 0.0
    %168 = vmatpush1.msra.mxu0 %v68
    %169 = vmatprep.subr.mxu0 0.0
    %170 = vmatpush1.msra.mxu0 %v67
    %171 = vmatprep.subr.mxu0 0.0
    %172 = vmatpush1.msra.mxu0 %v66
    %173 = vmatprep.subr.mxu0 0.0
    %174 = vmatpush1.msra.mxu0 %v65
    %175 = vmatprep.subr.mxu0 0.0
    %176 = vmatpush1.msra.mxu0 %v64
    %177 = vmatprep.subr.mxu0 0.0
    %178 = vmatpush1.msra.mxu0 %v63
    %179 = vmatprep.subr.mxu0 0.0
    %180 = vmatpush1.msra.mxu0 %v62
    %181 = vmatprep.subr.mxu0 0.0
    %182 = vmatpush1.msra.mxu0 %v61
    %183 = vmatprep.subr.mxu0 0.0
    %184 = vmatpush1.msra.mxu0 %v60
    %185 = vmatprep.subr.mxu0 0.0
    %186 = vmatpush1.msra.mxu0 %v59
    %187 = vmatprep.subr.mxu0 0.0
    %188 = vmatpush1.msra.mxu0 %v58
    %189 = vmatprep.subr.mxu0 0.0
    %190 = vmatpush1.msra.mxu0 %v57
    %191 = vmatprep.subr.mxu0 0.0
    %192 = vmatpush1.msra.mxu0 %v56
    %193 = vmatprep.subr.mxu0 0.0
    %194 = vmatpush1.msra.mxu0 %v55
    %195 = vmatprep.subr.mxu0 0.0
    %196 = vmatpush1.msra.mxu0 %v54
    %197 = vmatprep.subr.mxu0 0.0
    %198 = vmatpush1.msra.mxu0 %v53
    %199 = vmatprep.subr.mxu0 0.0
    %200 = vmatpush2.msra.mxu0 %v84
    %201 = vmatprep.subr.mxu0 0.0
    %202 = vmatpush2.msra.mxu0 %v83
    %203 = vmatprep.subr.mxu0 0.0
    %204 = vmatpush2.msra.mxu0 %v82
    %205 = vmatprep.subr.mxu0 0.0
    %206 = vmatpush2.msra.mxu0 %v81
    %207 = vmatprep.subr.mxu0 0.0
    %208 = vmatpush2.msra.mxu0 %v80
    %209 = vmatprep.subr.mxu0 0.0
    %210 = vmatpush2.msra.mxu0 %v79
    %211 = vmatprep.subr.mxu0 0.0
    %212 = vmatpush2.msra.mxu0 %v78
    %213 = vmatprep.subr.mxu0 0.0
    %214 = vmatpush2.msra.mxu0 %v77
    %215 = vmatprep.subr.mxu0 0.0
    %216 = vmatpush2.msra.mxu0 %v76
    %217 = vmatprep.subr.mxu0 0.0
    %218 = vmatpush2.msra.mxu0 %v75
    %219 = vmatprep.subr.mxu0 0.0
    %220 = vmatpush2.msra.mxu0 %v74
    %221 = vmatprep.subr.mxu0 0.0
    %222 = vmatpush2.msra.mxu0 %v73
    %223 = vmatprep.subr.mxu0 0.0
    %224 = vmatpush2.msra.mxu0 %v72
    %225 = vmatprep.subr.mxu0 0.0
    %226 = vmatpush2.msra.mxu0 %v71
    %227 = vmatprep.subr.mxu0 0.0
    %228 = vmatpush2.msra.mxu0 %v70
    %229 = vmatprep.subr.mxu0 0.0
    %230 = vmatpush2.msra.mxu0 %v69
    %231 = vmatprep.mubr.f32.mxu0 %v156
    %232 = vmatmul.mubr.f32.gmra.mxu0 %v155
    %v233 = vpop.f32.mrf.mxu0
    %v234 = vadd.f32 0.0, %v233
    %v235 = vpop.f32.mrf.mxu0
    %236 = vdwg.mxu0
    %237 = vmatprep.subr.mxu0 0.0
    %238 = vmatpush1.msra.mxu0 %v100
    %239 = vmatprep.subr.mxu0 0.0
    %240 = vmatpush1.msra.mxu0 %v99
    %241 = vmatprep.subr.mxu0 0.0
    %242 = vmatpush1.msra.mxu0 %v98
    %243 = vmatprep.subr.mxu0 0.0
    %244 = vmatpush1.msra.mxu0 %v97
    %245 = vmatprep.subr.mxu0 0.0
    %246 = vmatpush1.msra.mxu0 %v96
    %247 = vmatprep.subr.mxu0 0.0
    %248 = vmatpush1.msra.mxu0 %v95
    %249 = vmatprep.subr.mxu0 0.0
    %250 = vmatpush1.msra.mxu0 %v94
    %251 = vmatprep.subr.mxu0 0.0
    %252 = vmatpush1.msra.mxu0 %v93
    %253 = vmatprep.subr.mxu0 0.0
    %254 = vmatpush1.msra.mxu0 %v92
    %255 = vmatprep.subr.mxu0 0.0
    %256 = vmatpush1.msra.mxu0 %v91
    %257 = vmatprep.subr.mxu0 0.0
    %258 = vmatpush1.msra.mxu0 %v90
    %259 = vmatprep.subr.mxu0 0.0
    %260 = vmatpush1.msra.mxu0 %v89
    %261 = vmatprep.subr.mxu0 0.0
    %262 = vmatpush1.msra.mxu0 %v88
    %263 = vmatprep.subr.mxu0 0.0
    %264 = vmatpush1.msra.mxu0 %v87
    %265 = vmatprep.subr.mxu0 0.0
    %266 = vmatpush1.msra.mxu0 %v86
    %267 = vmatprep.subr.mxu0 0.0
    %268 = vmatpush1.msra.mxu0 %v85
    %269 = vmatprep.subr.mxu0 0.0
    %270 = vmatpush2.msra.mxu0 %v116
    %271 = vmatprep.subr.mxu0 0.0
    %272 = vmatpush2.msra.mxu0 %v115
    %273 = vmatprep.subr.mxu0 0.0
    %274 = vmatpush2.msra.mxu0 %v114
    %275 = vmatprep.subr.mxu0 0.0
    %276 = vmatpush2.msra.mxu0 %v113
    %277 = vmatprep.subr.mxu0 0.0
    %278 = vmatpush2.msra.mxu0 %v112
    %279 = vmatprep.subr.mxu0 0.0
    %280 = vmatpush2.msra.mxu0 %v111
    %281 = vmatprep.subr.mxu0 0.0
    %282 = vmatpush2.msra.mxu0 %v110
    %283 = vmatprep.subr.mxu0 0.0
    %284 = vmatpush2.msra.mxu0 %v109
    %285 = vmatprep.subr.mxu0 0.0
    %286 = vmatpush2.msra.mxu0 %v108
    %287 = vmatprep.subr.mxu0 0.0
    %288 = vmatpush2.msra.mxu0 %v107
    %289 = vmatprep.subr.mxu0 0.0
    %290 = vmatpush2.msra.mxu0 %v106
    %291 = vmatprep.subr.mxu0 0.0
    %292 = vmatpush2.msra.mxu0 %v105
    %293 = vmatprep.subr.mxu0 0.0
    %294 = vmatpush2.msra.mxu0 %v104
    %295 = vmatprep.subr.mxu0 0.0
    %296 = vmatpush2.msra.mxu0 %v103
    %297 = vmatprep.subr.mxu0 0.0
    %298 = vmatpush2.msra.mxu0 %v102
    %299 = vmatprep.subr.mxu0 0.0
    %300 = vmatpush2.msra.mxu0 %v101
    %301 = vmatprep.mubr.f32.mxu0 %v158
    %302 = vmatmul.mubr.f32.gmra.mxu0 %v157
    %v303 = vpop.f32.mrf.mxu0
    %v304 = vadd.f32 %v234, %v303
    %v305 = vpop.f32.mrf.mxu0
    %306 = vdwg.mxu0
    %307 = vmatprep.subr.mxu0 0.0
    %308 = vmatpush1.msra.mxu0 %v132
    %309 = vmatprep.subr.mxu0 0.0
    %310 = vmatpush1.msra.mxu0 %v131
    %311 = vmatprep.subr.mxu0 0.0
    %312 = vmatpush1.msra.mxu0 %v130
    %313 = vmatprep.subr.mxu0 0.0
    %314 = vmatpush1.msra.mxu0 %v129
    %315 = vmatprep.subr.mxu0 0.0
    %316 = vmatpush1.msra.mxu0 %v128
    %317 = vmatprep.subr.mxu0 0.0
    %318 = vmatpush1.msra.mxu0 %v127
    %319 = vmatprep.subr.mxu0 0.0
    %320 = vmatpush1.msra.mxu0 %v126
    %321 = vmatprep.subr.mxu0 0.0
    %322 = vmatpush1.msra.mxu0 %v125
    %323 = vmatprep.subr.mxu0 0.0
    %324 = vmatpush1.msra.mxu0 %v124
    %325 = vmatprep.subr.mxu0 0.0
    %326 = vmatpush1.msra.mxu0 %v123
    %327 = vmatprep.subr.mxu0 0.0
    %328 = vmatpush1.msra.mxu0 %v122
    %329 = vmatprep.subr.mxu0 0.0
    %330 = vmatpush1.msra.mxu0 %v121
    %331 = vmatprep.subr.mxu0 0.0
    %332 = vmatpush1.msra.mxu0 %v120
    %333 = vmatprep.subr.mxu0 0.0
    %334 = vmatpush1.msra.mxu0 %v119
    %335 = vmatprep.subr.mxu0 0.0
    %336 = vmatpush1.msra.mxu0 %v118
    %337 = vmatprep.subr.mxu0 0.0
    %338 = vmatpush1.msra.mxu0 %v117
    %339 = vmatprep.subr.mxu0 0.0
    %340 = vmatpush2.msra.mxu0 %v148
    %341 = vmatprep.subr.mxu0 0.0
    %342 = vmatpush2.msra.mxu0 %v147
    %343 = vmatprep.subr.mxu0 0.0
    %344 = vmatpush2.msra.mxu0 %v146
    %345 = vmatprep.subr.mxu0 0.0
    %346 = vmatpush2.msra.mxu0 %v145
    %347 = vmatprep.subr.mxu0 0.0
    %348 = vmatpush2.msra.mxu0 %v144
    %349 = vmatprep.subr.mxu0 0.0
    %350 = vmatpush2.msra.mxu0 %v143
    %351 = vmatprep.subr.mxu0 0.0
    %352 = vmatpush2.msra.mxu0 %v142
    %353 = vmatprep.subr.mxu0 0.0
    %354 = vmatpush2.msra.mxu0 %v141
    %355 = vmatprep.subr.mxu0 0.0
    %356 = vmatpush2.msra.mxu0 %v140
    %357 = vmatprep.subr.mxu0 0.0
    %358 = vmatpush2.msra.mxu0 %v139
    %359 = vmatprep.subr.mxu0 0.0
    %360 = vmatpush2.msra.mxu0 %v138
    %361 = vmatprep.subr.mxu0 0.0
    %362 = vmatpush2.msra.mxu0 %v137
    %363 = vmatprep.subr.mxu0 0.0
    %364 = vmatpush2.msra.mxu0 %v136
    %365 = vmatprep.subr.mxu0 0.0
    %366 = vmatpush2.msra.mxu0 %v135
    %367 = vmatprep.subr.mxu0 0.0
    %368 = vmatpush2.msra.mxu0 %v134
    %369 = vmatprep.subr.mxu0 0.0
    %370 = vmatpush2.msra.mxu0 %v133
    %371 = vmatprep.mubr.f32.mxu0 %v160
    %372 = vmatmul.mubr.f32.gmra.mxu0 %v159
    %v373 = vpop.f32.mrf.mxu0
    %v374 = vadd.f32 %v304, %v373
    %v375 = vpop.f32.mrf.mxu0
    %376 = vdwg.mxu0
    %v377 = vmul.f32 %v374, %v52
    %vm378 = vcmask 15360
    %379 = vst.msk [vmem:[#allocation2] sm:$0xff] %vm378, %v377
    // Predicated region
    $region10: #{tpu_custom_call.1} parent=1 // pred_check
      _
    $region11: #{tpu_custom_call.1} parent=1 // pred_check_branch
      %381 = sbr.rel (0) target = $region13
    $region12: #{tpu_custom_call.1} parent=1 // pred_region
      // Predicated region
      $region14: #{tpu_custom_call.1} parent=12 // pred_check
        _
      $region15: #{tpu_custom_call.1} parent=12 // pred_check_branch
        %383 = sbr.rel (0) target = $region17
      $region16: #{tpu_custom_call.1} parent=12 // pred_region
        // Predicated region
        $region18: #{tpu_custom_call.1} parent=16 // pred_check
          _
        $region19: #{tpu_custom_call.1} parent=16 // pred_check_branch
          %385 = sbr.rel target = $region21
        $region20: #{tpu_custom_call.1} parent=16 // pred_region
          // Predicated region
          $region33: #{tpu_custom_call.1} parent=20 // pred_check
            _
          $region34: #{tpu_custom_call.1} parent=20 // pred_check_branch
            %401 = sbr.rel (0) target = $region36
          $region35: #{tpu_custom_call.1} parent=20 // pred_region
            %s403 = ssub.s32 16, 1
            loop: start=0, step=1, limit=1
            $region37: #{tpu_custom_call.1} parent=35 // loop_pre_header
              _
            $region38: #{tpu_custom_call.1} parent=35 // loop_header
              %s405 = sphi 0, %s409
              %p406 = scmp.ge.s32.totalorder %s405, 1
              %s410 = sphi [#allocation2], [#allocation2]
              %s411 = sphi %s2, %s2
            $region39: #{tpu_custom_call.1} parent=35 // loop_header_branch
              %408 = sbr.rel (%p406) target = $region43
            $region40: #{tpu_custom_call.1} parent=35 // loop_body
              %v412 = vld [vmem:[%s410] sm:%s403]
              %413 = vst [vmem:[%s411] sm:%s403] %v412
            $region41: #{tpu_custom_call.1} parent=35 // loop_footer
              %s409 = sadd.s32 1, %s405
            $region42: #{tpu_custom_call.1} parent=35 // loop_footer_branch
              %404 = sbr.rel target = $region38
            $region43: #{tpu_custom_call.1} parent=35 // loop_exit
              _
          $region36: #{tpu_custom_call.1} parent=20 // pred_fallthru
            _
        $region21: #{tpu_custom_call.1} parent=16 // pred_fallthru
          _
        // Predicated region
        $region22: #{tpu_custom_call.1} parent=16 // pred_check
          _
        $region23: #{tpu_custom_call.1} parent=16 // pred_check_branch
          %387 = sbr.rel (0) target = $region25
        $region24: #{tpu_custom_call.1} parent=16 // pred_region
          %s389 = ssub.s32 16, 1
          loop: start=0, step=1, limit=1
          $region26: #{tpu_custom_call.1} parent=24 // loop_pre_header
            _
          $region27: #{tpu_custom_call.1} parent=24 // loop_header
            %s391 = sphi 0, %s395
            %p392 = scmp.ge.s32.totalorder %s391, 1
            %s396 = sphi [#allocation2], [#allocation2]
            %s397 = sphi %s2, %s2
          $region28: #{tpu_custom_call.1} parent=24 // loop_header_branch
            %394 = sbr.rel (%p392) target = $region32
          $region29: #{tpu_custom_call.1} parent=24 // loop_body
            %v398 = vld [vmem:[%s396] sm:%s389]
            %399 = vst [vmem:[%s397] sm:%s389] %v398
          $region30: #{tpu_custom_call.1} parent=24 // loop_footer
            %s395 = sadd.s32 1, %s391
          $region31: #{tpu_custom_call.1} parent=24 // loop_footer_branch
            %390 = sbr.rel target = $region27
          $region32: #{tpu_custom_call.1} parent=24 // loop_exit
            _
        $region25: #{tpu_custom_call.1} parent=16 // pred_fallthru
          _
      $region17: #{tpu_custom_call.1} parent=12 // pred_fallthru
        _
      %414 = vnop
    $region13: #{tpu_custom_call.1} parent=1 // pred_fallthru
      _
    // Predicated region
    $region44: #{tpu_custom_call.1} parent=1 // pred_check
      _
    $region45: #{tpu_custom_call.1} parent=1 // pred_check_branch
      %416 = sbr.rel (0) target = $region47
    $region46: #{tpu_custom_call.1} parent=1 // pred_region
      _
    $region47: #{tpu_custom_call.1} parent=1 // pred_fallthru
      _

</llo_original>
